<compile_context>
chip_gen: v7x
topology: tpu7x:2x2x1
jax: 0.10.0
libtpu: 0.0.40
codegen_flags: <defaults>
</compile_context>

<pallas_src>
import jax
import jax.numpy as jnp
from jax import lax
from jax.experimental import pallas as pl
from jax.experimental.pallas import tpu as pltpu


def _mlp_kernel(x_ref, w1_ref, b1_ref, w2_ref, b2_ref, w3_ref, b3_ref, o_ref):
    # x_ref:  [bm, IN]                     (row tile of the input)
    # w*_ref: PyTorch layout [OUT_i, IN_i]; b*_ref: [OUT_i, 1]
    # o_ref:  [OUT, bm]                    (feature-major, batch lane-dense)
    x = x_ref[...]

    # h1 = W1 @ x^T  : contract IN (w1 dim 1) with IN (x dim 1) -> [H1, bm]
    h = lax.dot_general(w1_ref[...], x, (((1,), (1,)), ((), ())),
                        preferred_element_type=jnp.float32)
    h = jnp.maximum(h + b1_ref[...], 0.0)

    # h2 = W2 @ h1   : contract H1 -> [H2, bm]
    h = lax.dot_general(w2_ref[...], h, (((1,), (0,)), ((), ())),
                        preferred_element_type=jnp.float32)
    h = jnp.maximum(h + b2_ref[...], 0.0)

    # h3 = W3 @ h2   : contract H2 -> [OUT, bm]
    h = lax.dot_general(w3_ref[...], h, (((1,), (0,)), ((), ())),
                        preferred_element_type=jnp.float32)
    o_ref[...] = (h + b3_ref[...]).astype(o_ref.dtype)


def _choose_bm(B, target_bm):
    """Lane-dense (multiple-of-128) row tile; >=2 grid blocks when B allows."""
    if B <= 128:
        return 128
    half_rounded = 128 * pl.cdiv(pl.cdiv(B, 2), 128)  # ~B/2, rounded up to 128
    return max(128, min(target_bm, half_rounded))


def position_forward(x, w1, b1, w2, b2, w3, b3, *, target_bm=4096):
    """Fused forward of the `position` MLP.

    x:  [B, IN] float32
    w1: [24, IN], b1: [24]
    w2: [24, 24], b2: [24]
    w3: [6, 24],  b3: [6]    (all PyTorch nn.Linear conventions)
    Returns [B, 6].
    """
    B, IN = x.shape
    H1 = w1.shape[0]
    H2 = w2.shape[0]
    OUT = w3.shape[0]

    bm = _choose_bm(B, target_bm)
    n_blocks = pl.cdiv(B, bm)  # ragged last block handled by Pallas; no jnp.pad

    # Biases as [H, 1] so they broadcast against feature-major [H, bm] tiles.
    b1_c = b1.reshape(H1, 1)
    b2_c = b2.reshape(H2, 1)
    b3_c = b3.reshape(OUT, 1)

    out_t = pl.pallas_call(
        _mlp_kernel,
        out_shape=jax.ShapeDtypeStruct((OUT, B), x.dtype),
        grid_spec=pl.GridSpec(
            grid=(n_blocks,),
            in_specs=[
                # x: tiled over the batch grid axis (row-major tile in).
                pl.BlockSpec((bm, IN), lambda i: (i, 0)),
                # weights/biases: constant index_map -> VMEM-resident, one DMA.
                pl.BlockSpec((H1, IN), lambda i: (0, 0)),
                pl.BlockSpec((H1, 1), lambda i: (0, 0)),
                pl.BlockSpec((H2, H1), lambda i: (0, 0)),
                pl.BlockSpec((H2, 1), lambda i: (0, 0)),
                pl.BlockSpec((OUT, H2), lambda i: (0, 0)),
                pl.BlockSpec((OUT, 1), lambda i: (0, 0)),
            ],
            # Lane-dense output: batch on the 128-lane axis.
            out_specs=pl.BlockSpec((OUT, bm), lambda i: (0, i)),
        ),
        compiler_params=pltpu.CompilerParams(
            dimension_semantics=("parallel",),  # batch blocks are independent
        ),
    )(x, w1, b1_c, w2, b2_c, w3, b3_c)

    # Cheap [6, B] -> [B, 6] transpose back to the PyTorch output layout.
    return out_t.T


def _reference(x, w1, b1, w2, b2, w3, b3):
    h = jnp.maximum(x @ w1.T + b1, 0.0)
    h = jnp.maximum(h @ w2.T + b2, 0.0)
    return h @ w3.T + b3


if __name__ == "__main__":
    key = jax.random.PRNGKey(0)
    kx, k1, k2, k3, k4, k5, k6 = jax.random.split(key, 7)

    B, IN, H1, H2, OUT = 200, 16, 24, 24, 6  # B deliberately not a tile multiple

    x = jax.random.normal(kx, (B, IN), dtype=jnp.float32)

    def linear_init(kw, kb, out_dim, in_dim):
        bound = 1.0 / (in_dim ** 0.5)
        w = jax.random.uniform(kw, (out_dim, in_dim), jnp.float32, -bound, bound)
        b = jax.random.uniform(kb, (out_dim,), jnp.float32, -bound, bound)
        return w, b

    w1, b1 = linear_init(k1, k2, H1, IN)
    w2, b2 = linear_init(k3, k4, H2, H1)
    w3, b3 = linear_init(k5, k6, OUT, H2)

    y = position_forward(x, w1, b1, w2, b2, w3, b3)
    y = jax.block_until_ready(y)

    y_ref = _reference(x, w1, b1, w2, b2, w3, b3)
    assert y.shape == (B, OUT)
    assert jnp.allclose(y, y_ref, atol=1e-3, rtol=1e-3), (
        float(jnp.max(jnp.abs(y - y_ref)))
    )

    print("KERNEL_OK")
</pallas_src>

<mosaic_0001>
module attributes {stable_mosaic.version = 11 : i64} {
  func.func @_mlp_kernel(%arg0: i32, %arg1: memref<128x16xf32, #tpu.memory_space<vmem>>, %arg2: memref<24x16xf32, #tpu.memory_space<vmem>>, %arg3: memref<24x1xf32, #tpu.memory_space<vmem>>, %arg4: memref<24x24xf32, #tpu.memory_space<vmem>>, %arg5: memref<24x1xf32, #tpu.memory_space<vmem>>, %arg6: memref<6x24xf32, #tpu.memory_space<vmem>>, %arg7: memref<6x1xf32, #tpu.memory_space<vmem>>, %arg8: memref<6x128xf32, #tpu.memory_space<vmem>>) attributes {dimension_semantics = [#tpu.dimension_semantics<parallel>], iteration_bounds = array<i64: 2>, scalar_prefetch = 0 : i64, scratch_operands = 0 : i64, tpu.core_type = #tpu.core_type<tc>, window_params = [{transform_indices = @transform_0, window_bounds = array<i64: 128, 16>}, {pipeline_mode = #tpu.pipeline_mode<synchronous>, transform_indices = @transform_1, window_bounds = array<i64: 24, 16>}, {pipeline_mode = #tpu.pipeline_mode<synchronous>, transform_indices = @transform_2, window_bounds = array<i64: 24, 1>}, {pipeline_mode = #tpu.pipeline_mode<synchronous>, transform_indices = @transform_3, window_bounds = array<i64: 24, 24>}, {pipeline_mode = #tpu.pipeline_mode<synchronous>, transform_indices = @transform_4, window_bounds = array<i64: 24, 1>}, {pipeline_mode = #tpu.pipeline_mode<synchronous>, transform_indices = @transform_5, window_bounds = array<i64: 6, 24>}, {pipeline_mode = #tpu.pipeline_mode<synchronous>, transform_indices = @transform_6, window_bounds = array<i64: 6, 1>}, {transform_indices = @transform_7, window_bounds = array<i64: 6, 128>}]} {
    %c0 = arith.constant 0 : index
    %c0_0 = arith.constant 0 : index
    %0 = vector.load %arg1[%c0, %c0_0] : memref<128x16xf32, #tpu.memory_space<vmem>>, vector<128x16xf32>
    %c0_1 = arith.constant 0 : index
    %c0_2 = arith.constant 0 : index
    %1 = vector.load %arg2[%c0_1, %c0_2] : memref<24x16xf32, #tpu.memory_space<vmem>>, vector<24x16xf32>
    %cst = arith.constant dense<0.000000e+00> : vector<24x128xf32>
    %2 = tpu.matmul %1, %0, %cst {dimension_numbers = #tpu.dot_dimension_numbers<[1], [1], [0], [0], [0, 0, 1, 0], [], []>} : vector<24x16xf32>, vector<128x16xf32>, vector<24x128xf32> -> vector<24x128xf32>
    %c0_3 = arith.constant 0 : index
    %c0_4 = arith.constant 0 : index
    %3 = vector.load %arg3[%c0_3, %c0_4] : memref<24x1xf32, #tpu.memory_space<vmem>>, vector<24x1xf32>
    %4 = vector.broadcast %3 : vector<24x1xf32> to vector<24x128xf32>
    %5 = arith.addf %2, %4 : vector<24x128xf32>
    %cst_5 = arith.constant 0.000000e+00 : f32
    %6 = vector.broadcast %cst_5 : f32 to vector<24x128xf32>
    %7 = arith.maximumf %5, %6 : vector<24x128xf32>
    %c0_6 = arith.constant 0 : index
    %c0_7 = arith.constant 0 : index
    %8 = vector.load %arg4[%c0_6, %c0_7] : memref<24x24xf32, #tpu.memory_space<vmem>>, vector<24x24xf32>
    %cst_8 = arith.constant dense<0.000000e+00> : vector<24x128xf32>
    %9 = tpu.matmul %8, %7, %cst_8 {dimension_numbers = #tpu.dot_dimension_numbers<[1], [0], [0], [1], [0, 0, 1, 1], [], []>} : vector<24x24xf32>, vector<24x128xf32>, vector<24x128xf32> -> vector<24x128xf32>
    %c0_9 = arith.constant 0 : index
    %c0_10 = arith.constant 0 : index
    %10 = vector.load %arg5[%c0_9, %c0_10] : memref<24x1xf32, #tpu.memory_space<vmem>>, vector<24x1xf32>
    %11 = vector.broadcast %10 : vector<24x1xf32> to vector<24x128xf32>
    %12 = arith.addf %9, %11 : vector<24x128xf32>
    %cst_11 = arith.constant 0.000000e+00 : f32
    %13 = vector.broadcast %cst_11 : f32 to vector<24x128xf32>
    %14 = arith.maximumf %12, %13 : vector<24x128xf32>
    %c0_12 = arith.constant 0 : index
    %c0_13 = arith.constant 0 : index
    %15 = vector.load %arg6[%c0_12, %c0_13] : memref<6x24xf32, #tpu.memory_space<vmem>>, vector<6x24xf32>
    %cst_14 = arith.constant dense<0.000000e+00> : vector<6x128xf32>
    %16 = tpu.matmul %15, %14, %cst_14 {dimension_numbers = #tpu.dot_dimension_numbers<[1], [0], [0], [1], [0, 0, 1, 1], [], []>} : vector<6x24xf32>, vector<24x128xf32>, vector<6x128xf32> -> vector<6x128xf32>
    %c0_15 = arith.constant 0 : index
    %c0_16 = arith.constant 0 : index
    %17 = vector.load %arg7[%c0_15, %c0_16] : memref<6x1xf32, #tpu.memory_space<vmem>>, vector<6x1xf32>
    %18 = vector.broadcast %17 : vector<6x1xf32> to vector<6x128xf32>
    %19 = arith.addf %16, %18 : vector<6x128xf32>
    %c0_17 = arith.constant 0 : index
    %c0_18 = arith.constant 0 : index
    %20 = vector.load %arg8[%c0_17, %c0_18] : memref<6x128xf32, #tpu.memory_space<vmem>>, vector<6x128xf32>
    tpu.vector_store %arg8[%c0_17, %c0_18], %19 {strides = array<i32>} : memref<6x128xf32, #tpu.memory_space<vmem>>, vector<6x128xf32>,
    return
  }
  func.func @transform_0(%arg0: i32) -> (i32, i32) {
    %c0_i32 = arith.constant 0 : i32
    %c0_i32_0 = arith.constant 0 : i32
    return %arg0, %c0_i32 : i32, i32
  }
  func.func @transform_1(%arg0: i32) -> (i32, i32) {
    %c0_i32 = arith.constant 0 : i32
    %c0_i32_0 = arith.constant 0 : i32
    %c0_i32_1 = arith.constant 0 : i32
    return %c0_i32, %c0_i32_0 : i32, i32
  }
  func.func @transform_2(%arg0: i32) -> (i32, i32) {
    %c0_i32 = arith.constant 0 : i32
    %c0_i32_0 = arith.constant 0 : i32
    %c0_i32_1 = arith.constant 0 : i32
    return %c0_i32, %c0_i32_0 : i32, i32
  }
  func.func @transform_3(%arg0: i32) -> (i32, i32) {
    %c0_i32 = arith.constant 0 : i32
    %c0_i32_0 = arith.constant 0 : i32
    %c0_i32_1 = arith.constant 0 : i32
    return %c0_i32, %c0_i32_0 : i32, i32
  }
  func.func @transform_4(%arg0: i32) -> (i32, i32) {
    %c0_i32 = arith.constant 0 : i32
    %c0_i32_0 = arith.constant 0 : i32
    %c0_i32_1 = arith.constant 0 : i32
    return %c0_i32, %c0_i32_0 : i32, i32
  }
  func.func @transform_5(%arg0: i32) -> (i32, i32) {
    %c0_i32 = arith.constant 0 : i32
    %c0_i32_0 = arith.constant 0 : i32
    %c0_i32_1 = arith.constant 0 : i32
    return %c0_i32, %c0_i32_0 : i32, i32
  }
  func.func @transform_6(%arg0: i32) -> (i32, i32) {
    %c0_i32 = arith.constant 0 : i32
    %c0_i32_0 = arith.constant 0 : i32
    %c0_i32_1 = arith.constant 0 : i32
    return %c0_i32, %c0_i32_0 : i32, i32
  }
  func.func @transform_7(%arg0: i32) -> (i32, i32) {
    %c0_i32 = arith.constant 0 : i32
    %c0_i32_0 = arith.constant 0 : i32
    return %c0_i32, %arg0 : i32, i32
  }
}

</mosaic_0001>

<llo_original>
// kernel: tpu_custom_call.1
$region0: #{tpu_custom_call.1}
  #allocation0 [shape = 'u32[]', space=smem, size = 0x4, offset = 0x4, fixed_abs, tag = 'smem constant byte address 0x4 - core index']
  #allocation1 [shape = 'u32[144,128]{1,0:T(1,128)}', space=vmem, size = 0x12000, scoped, tag = 'internal scratch']
  %s0 = inlined_call_operand.vmem [shape: f32[200,16], index: 0, kind: input, shape index: {}]
  %s1 = inlined_call_operand.vmem [shape: f32[24,16], index: 1, kind: input, shape index: {}]
  %s2 = inlined_call_operand.vmem [shape: f32[24,1], index: 2, kind: input, shape index: {}]
  %s3 = inlined_call_operand.vmem [shape: f32[24,24], index: 3, kind: input, shape index: {}]
  %s4 = inlined_call_operand.vmem [shape: f32[24,1], index: 4, kind: input, shape index: {}]
  %s5 = inlined_call_operand.vmem [shape: f32[6,24], index: 5, kind: input, shape index: {}]
  %s6 = inlined_call_operand.vmem [shape: f32[6,1], index: 6, kind: input, shape index: {}]
  %s7 = inlined_call_operand.hbm [shape: f32[6,200], index: 7, kind: output, shape index: {}]
  %s8 = sld [smem:[#allocation0]]
  $region61: #{tpu_custom_call.1} parent=0
    _
  %s10 = ssub.s32 1, %s8
  %s11 = scalar_select 0, %s10, %s8
  $region1: #{tpu_custom_call.1} parent=0
    #allocation2 [shape = 'u8[8192]{0}', space=vmem, size = 0x2000, scoped, tag = 'output window, operand 0']
    #allocation3 [shape = 's32[2]{0}', space=sflag, size = 0x8, scoped, tag = 'scoped memory for tpu_custom_call.1']
    %12 = vsyncpa [#allocation3], 0
    %s13 = scalar_lea.sflag [#allocation3], 1
    %14 = vsyncpa %s13, 0
    loop: start=0, step=1, limit=4
    $region2: #{tpu_custom_call.1} parent=1 // loop_pre_header
      _
    $region3: #{tpu_custom_call.1} parent=1 // loop_header
      %s16 = sphi 0, %s20
      %p17 = scmp.ge.s32.totalorder %s16, 4
      %s26 = sphi 0, %s28
      %s29 = sphi 0, %s26
      %s30 = sphi 0, %s29
      %s46 = sphi 0, %s30
      %s50 = sphi 0, %s50
      %s52 = sphi 0, %s50
      %s53 = sphi 0, %s52
      %s67 = sphi 0, %s53
      %s71 = sphi 0, %s71
      %s73 = sphi 0, %s71
      %s74 = sphi 0, %s73
      %s88 = sphi 0, %s74
      %s92 = sphi 0, %s92
      %s94 = sphi 0, %s92
      %s95 = sphi 0, %s94
      %s109 = sphi 0, %s95
      %s113 = sphi 0, %s113
      %s115 = sphi 0, %s113
      %s116 = sphi 0, %s115
      %s130 = sphi 0, %s116
      %s134 = sphi 0, %s134
      %s136 = sphi 0, %s134
      %s137 = sphi 0, %s136
      %s151 = sphi 0, %s137
      %s155 = sphi 0, %s155
      %s157 = sphi 0, %s155
      %s158 = sphi 0, %s157
      %s172 = sphi 0, %s158
      %s178 = sphi 0, %s180
      %s181 = sphi 0, %s178
      %s182 = sphi 0, %s181
      %s198 = sphi 0, %s182
    $region4: #{tpu_custom_call.1} parent=1 // loop_header_branch
      %19 = sbr.rel (%p17) target = $region8
    $region5: #{tpu_custom_call.1} parent=1 // loop_body
      %s21 = ssub.s32 %s16, 1
      %s22 = ssub.s32 %s16, 2
      %s23 = sadd.s32 %s16, 1
      %s24 = ssub.s32 %s16, %s23
      %p25 = scmp.eq.s32.totalorder %s24, 0
      %s27 = sadd.s32 %s26, 1
      %s28 = scalar_select %p25, %s26, %s27
      %p31 = pneg %p25
      %p32 = scmp.eq.s32.totalorder %s16, 1
      %p33 = por %p31, %p32
      %p34 = scmp.ne.s32.totalorder %s26, %s29
      %p35 = scmp.eq.s32.totalorder %s16, 0
      %p36 = por %p34, %p35
      %p37 = scmp.ne.s32.totalorder %s26, %s29
      %p38 = scmp.eq.s32.totalorder %s21, 1
      %p39 = por %p37, %p38
      %p40 = scmp.ne.s32.totalorder %s29, %s30
      %p41 = scmp.eq.s32.totalorder %s21, 0
      %p42 = por %p40, %p41
      %p43 = scmp.ne.s32.totalorder %s29, %s30
      %p44 = scmp.eq.s32.totalorder %s22, 1
      %p45 = por %p43, %p44
      %p47 = scmp.ne.s32.totalorder %s30, %s46
      %p48 = scmp.eq.s32.totalorder %s22, 0
      %p49 = por %p47, %p48
      %s51 = sadd.s32 %s50, 1
      %p54 = scmp.eq.s32.totalorder %s16, 1
      %p55 = scmp.ne.s32.totalorder %s50, %s52
      %p56 = scmp.eq.s32.totalorder %s16, 0
      %p57 = por %p55, %p56
      %p58 = scmp.ne.s32.totalorder %s50, %s52
      %p59 = scmp.eq.s32.totalorder %s21, 1
      %p60 = por %p58, %p59
      %p61 = scmp.ne.s32.totalorder %s52, %s53
      %p62 = scmp.eq.s32.totalorder %s21, 0
      %p63 = por %p61, %p62
      %p64 = scmp.ne.s32.totalorder %s52, %s53
      %p65 = scmp.eq.s32.totalorder %s22, 1
      %p66 = por %p64, %p65
      %p68 = scmp.ne.s32.totalorder %s53, %s67
      %p69 = scmp.eq.s32.totalorder %s22, 0
      %p70 = por %p68, %p69
      %s72 = sadd.s32 %s71, 1
      %p75 = scmp.eq.s32.totalorder %s16, 1
      %p76 = scmp.ne.s32.totalorder %s71, %s73
      %p77 = scmp.eq.s32.totalorder %s16, 0
      %p78 = por %p76, %p77
      %p79 = scmp.ne.s32.totalorder %s71, %s73
      %p80 = scmp.eq.s32.totalorder %s21, 1
      %p81 = por %p79, %p80
      %p82 = scmp.ne.s32.totalorder %s73, %s74
      %p83 = scmp.eq.s32.totalorder %s21, 0
      %p84 = por %p82, %p83
      %p85 = scmp.ne.s32.totalorder %s73, %s74
      %p86 = scmp.eq.s32.totalorder %s22, 1
      %p87 = por %p85, %p86
      %p89 = scmp.ne.s32.totalorder %s74, %s88
      %p90 = scmp.eq.s32.totalorder %s22, 0
      %p91 = por %p89, %p90
      %s93 = sadd.s32 %s92, 1
      %p96 = scmp.eq.s32.totalorder %s16, 1
      %p97 = scmp.ne.s32.totalorder %s92, %s94
      %p98 = scmp.eq.s32.totalorder %s16, 0
      %p99 = por %p97, %p98
      %p100 = scmp.ne.s32.totalorder %s92, %s94
      %p101 = scmp.eq.s32.totalorder %s21, 1
      %p102 = por %p100, %p101
      %p103 = scmp.ne.s32.totalorder %s94, %s95
      %p104 = scmp.eq.s32.totalorder %s21, 0
      %p105 = por %p103, %p104
      %p106 = scmp.ne.s32.totalorder %s94, %s95
      %p107 = scmp.eq.s32.totalorder %s22, 1
      %p108 = por %p106, %p107
      %p110 = scmp.ne.s32.totalorder %s95, %s109
      %p111 = scmp.eq.s32.totalorder %s22, 0
      %p112 = por %p110, %p111
      %s114 = sadd.s32 %s113, 1
      %p117 = scmp.eq.s32.totalorder %s16, 1
      %p118 = scmp.ne.s32.totalorder %s113, %s115
      %p119 = scmp.eq.s32.totalorder %s16, 0
      %p120 = por %p118, %p119
      %p121 = scmp.ne.s32.totalorder %s113, %s115
      %p122 = scmp.eq.s32.totalorder %s21, 1
      %p123 = por %p121, %p122
      %p124 = scmp.ne.s32.totalorder %s115, %s116
      %p125 = scmp.eq.s32.totalorder %s21, 0
      %p126 = por %p124, %p125
      %p127 = scmp.ne.s32.totalorder %s115, %s116
      %p128 = scmp.eq.s32.totalorder %s22, 1
      %p129 = por %p127, %p128
      %p131 = scmp.ne.s32.totalorder %s116, %s130
      %p132 = scmp.eq.s32.totalorder %s22, 0
      %p133 = por %p131, %p132
      %s135 = sadd.s32 %s134, 1
      %p138 = scmp.eq.s32.totalorder %s16, 1
      %p139 = scmp.ne.s32.totalorder %s134, %s136
      %p140 = scmp.eq.s32.totalorder %s16, 0
      %p141 = por %p139, %p140
      %p142 = scmp.ne.s32.totalorder %s134, %s136
      %p143 = scmp.eq.s32.totalorder %s21, 1
      %p144 = por %p142, %p143
      %p145 = scmp.ne.s32.totalorder %s136, %s137
      %p146 = scmp.eq.s32.totalorder %s21, 0
      %p147 = por %p145, %p146
      %p148 = scmp.ne.s32.totalorder %s136, %s137
      %p149 = scmp.eq.s32.totalorder %s22, 1
      %p150 = por %p148, %p149
      %p152 = scmp.ne.s32.totalorder %s137, %s151
      %p153 = scmp.eq.s32.totalorder %s22, 0
      %p154 = por %p152, %p153
      %s156 = sadd.s32 %s155, 1
      %p159 = scmp.eq.s32.totalorder %s16, 1
      %p160 = scmp.ne.s32.totalorder %s155, %s157
      %p161 = scmp.eq.s32.totalorder %s16, 0
      %p162 = por %p160, %p161
      %p163 = scmp.ne.s32.totalorder %s155, %s157
      %p164 = scmp.eq.s32.totalorder %s21, 1
      %p165 = por %p163, %p164
      %p166 = scmp.ne.s32.totalorder %s157, %s158
      %p167 = scmp.eq.s32.totalorder %s21, 0
      %p168 = por %p166, %p167
      %p169 = scmp.ne.s32.totalorder %s157, %s158
      %p170 = scmp.eq.s32.totalorder %s22, 1
      %p171 = por %p169, %p170
      %p173 = scmp.ne.s32.totalorder %s158, %s172
      %p174 = scmp.eq.s32.totalorder %s22, 0
      %p175 = por %p173, %p174
      %s176 = ssub.s32 %s16, %s23
      %p177 = scmp.eq.s32.totalorder %s176, 0
      %s179 = sadd.s32 %s178, 1
      %s180 = scalar_select %p177, %s178, %s179
      %p183 = pneg %p177
      %p184 = scmp.eq.s32.totalorder %s16, 1
      %p185 = por %p183, %p184
      %p186 = scmp.ne.s32.totalorder %s178, %s181
      %p187 = scmp.eq.s32.totalorder %s16, 0
      %p188 = por %p186, %p187
      %p189 = scmp.ne.s32.totalorder %s178, %s181
      %p190 = scmp.eq.s32.totalorder %s21, 1
      %p191 = por %p189, %p190
      %p192 = scmp.ne.s32.totalorder %s181, %s182
      %p193 = scmp.eq.s32.totalorder %s21, 0
      %p194 = por %p192, %p193
      %p195 = scmp.ne.s32.totalorder %s181, %s182
      %p196 = scmp.eq.s32.totalorder %s22, 1
      %p197 = por %p195, %p196
      %p199 = scmp.ne.s32.totalorder %s182, %s198
      %p200 = scmp.eq.s32.totalorder %s22, 0
      %p201 = por %p199, %p200
      %p202 = scmp.le.s32.totalorder 1, %s16
      %p203 = scmp.lt.s32.totalorder %s16, 3
      %p204 = pnand %p202, %p203
      %p205 = pneg %p204
      // Predicated region
      $region9: #{tpu_custom_call.1} parent=5 // pred_check
        _
      $region10: #{tpu_custom_call.1} parent=5 // pred_check_branch
        %207 = sbr.rel (%p204) target = $region12
      $region11: #{tpu_custom_call.1} parent=5 // pred_region
        %s208 = ssub.s32 %s16, 1
        // Predicated region
        $region13: #{tpu_custom_call.1} parent=11 // pred_check
          %p209 = pneg %p63
        $region14: #{tpu_custom_call.1} parent=11 // pred_check_branch
          %211 = sbr.rel (%p209) target = $region16
        $region15: #{tpu_custom_call.1} parent=11 // pred_region
          _
        $region16: #{tpu_custom_call.1} parent=11 // pred_fallthru
          _
        // Predicated region
        $region17: #{tpu_custom_call.1} parent=11 // pred_check
          %p212 = pneg %p84
        $region18: #{tpu_custom_call.1} parent=11 // pred_check_branch
          %214 = sbr.rel (%p212) target = $region20
        $region19: #{tpu_custom_call.1} parent=11 // pred_region
          _
        $region20: #{tpu_custom_call.1} parent=11 // pred_fallthru
          _
        // Predicated region
        $region21: #{tpu_custom_call.1} parent=11 // pred_check
          %p215 = pneg %p105
        $region22: #{tpu_custom_call.1} parent=11 // pred_check_branch
          %217 = sbr.rel (%p215) target = $region24
        $region23: #{tpu_custom_call.1} parent=11 // pred_region
          _
        $region24: #{tpu_custom_call.1} parent=11 // pred_fallthru
          _
        // Predicated region
        $region25: #{tpu_custom_call.1} parent=11 // pred_check
          %p218 = pneg %p126
        $region26: #{tpu_custom_call.1} parent=11 // pred_check_branch
          %220 = sbr.rel (%p218) target = $region28
        $region27: #{tpu_custom_call.1} parent=11 // pred_region
          _
        $region28: #{tpu_custom_call.1} parent=11 // pred_fallthru
          _
        // Predicated region
        $region29: #{tpu_custom_call.1} parent=11 // pred_check
          %p221 = pneg %p147
        $region30: #{tpu_custom_call.1} parent=11 // pred_check_branch
          %223 = sbr.rel (%p221) target = $region32
        $region31: #{tpu_custom_call.1} parent=11 // pred_region
          _
        $region32: #{tpu_custom_call.1} parent=11 // pred_fallthru
          _
        // Predicated region
        $region33: #{tpu_custom_call.1} parent=11 // pred_check
          %p224 = pneg %p168
        $region34: #{tpu_custom_call.1} parent=11 // pred_check_branch
          %226 = sbr.rel (%p224) target = $region36
        $region35: #{tpu_custom_call.1} parent=11 // pred_region
          _
        $region36: #{tpu_custom_call.1} parent=11 // pred_fallthru
          _
      $region12: #{tpu_custom_call.1} parent=5 // pred_fallthru
        _
      %p227 = scmp.lt.s32.totalorder %s16, 2
      // Predicated region
      $region37: #{tpu_custom_call.1} parent=5 // pred_check
        %p228 = pneg %p227
      $region38: #{tpu_custom_call.1} parent=5 // pred_check_branch
        %230 = sbr.rel (%p228) target = $region40
      $region39: #{tpu_custom_call.1} parent=5 // pred_region
        // Predicated region
        $region41: #{tpu_custom_call.1} parent=39 // pred_check
          %p231 = pneg %p36
        $region42: #{tpu_custom_call.1} parent=39 // pred_check_branch
          %233 = sbr.rel (%p231) target = $region44
        $region43: #{tpu_custom_call.1} parent=39 // pred_region
          %s234 = smul.u32 16, %s16
          %s235 = ssub.s32 25, %s234
          %p236 = scmp.lt.s32.totalorder %s235, 16
          %s237 = scalar_select %p236, %s235, 16
          %s238 = smul.u32 128, %s237
          %p239 = scmp.lt.s32.totalorder %s234, 24
          %s240 = scalar_select %p239, %s234, 24
          %s241 = smul.addr %s240, 8
          %s242 = scalar_lea.vmem %s0, %s241
          %s243 = smul.u32 16, %s16
          %s244 = ssub.s32 25, %s243
          %p245 = scmp.lt.s32.totalorder %s244, 16
          %s246 = scalar_select %p245, %s244, 16
          %s247 = smul.u32 128, %s246
        $region44: #{tpu_custom_call.1} parent=39 // pred_fallthru
          _
      $region40: #{tpu_custom_call.1} parent=5 // pred_fallthru
        _
      %p248 = scmp.le.s32.totalorder 1, %s16
      %p249 = scmp.lt.s32.totalorder %s16, 3
      %p250 = pnand %p248, %p249
      %p251 = pneg %p250
      // Predicated region
      $region45: #{tpu_custom_call.1} parent=5 // pred_check
        _
      $region46: #{tpu_custom_call.1} parent=5 // pred_check_branch
        %253 = sbr.rel (%p250) target = $region48
      $region47: #{tpu_custom_call.1} parent=5 // pred_region
        %s254 = ssub.s32 %s16, 1
        %s255 = smul.u32 16, %s21
        %s256 = ssub.s32 25, %s255
        %p257 = scmp.lt.s32.totalorder %s256, 16
        %s258 = scalar_select %p257, %s256, 16
        %s259 = smul.u32 128, %s258
        %p260 = scmp.lt.s32.totalorder %s255, 24
        %s261 = scalar_select %p260, %s255, 24
        %s262 = smul.addr %s261, 8
        %s263 = scalar_lea.vmem %s0, %s262
        %p264 = pneg %p42
        %p265 = pneg %p39
        %p266 = pneg %p63
        %p267 = pneg %p60
        %p268 = pneg %p84
        %p269 = pneg %p81
        %p270 = pneg %p105
        %p271 = pneg %p102
        %p272 = pneg %p126
        %p273 = pneg %p123
        %p274 = pneg %p147
        %p275 = pneg %p144
        %p276 = pneg %p168
        %p277 = pneg %p165
        %p278 = pneg %p194
        %p279 = pneg %p191
        %s280 = sand.u32 %s181, 1
        %s281 = scalar_lea.sflag [#allocation3], %s280
        %s282 = sand.u32 %s181, 1
        %s283 = smul.addr %s282, 8
        %s284 = scalar_lea.vmem [#allocation2], %s283
        %s285 = smul.u32 16, %s21
        %s286 = ssub.s32 25, %s285
        %p287 = scmp.lt.s32.totalorder %s286, 16
        %s288 = scalar_select %p287, %s286, 16
        %s289 = smul.u32 128, %s288
        %p290 = scmp.lt.s32.totalorder %s285, 24
        %s291 = scalar_select %p290, %s285, 24
        %s292 = smul.addr %s291, 8
        %s293 = scalar_lea.vmem %s0, %s292
        %s294 = smul.u32 16, %s21
        %s295 = ssub.s32 25, %s294
        %p296 = scmp.lt.s32.totalorder %s295, 16
        %s297 = scalar_select %p296, %s295, 16
        %s298 = smul.u32 128, %s297
        %v299 = vld [vmem:[%s293] sm:$0xff]
        %v300 = vld [vmem:[%s293 + $0x8] sm:$0xff]
        %v301 = vld [vmem:[%s293 + $0x10] sm:$0xff]
        %v302 = vld [vmem:[%s293 + $0x18] sm:$0xff]
        %v303 = vld [vmem:[%s293 + $0x20] sm:$0xff]
        %v304 = vld [vmem:[%s293 + $0x28] sm:$0xff]
        %v305 = vld [vmem:[%s293 + $0x30] sm:$0xff]
        %v306 = vld [vmem:[%s293 + $0x38] sm:$0xff]
        %v307 = vld [vmem:[%s293 + $0x40] sm:$0xff]
        %v308 = vld [vmem:[%s293 + $0x48] sm:$0xff]
        %v309 = vld [vmem:[%s293 + $0x50] sm:$0xff]
        %v310 = vld [vmem:[%s293 + $0x58] sm:$0xff]
        %v311 = vld [vmem:[%s293 + $0x60] sm:$0xff]
        %v312 = vld [vmem:[%s293 + $0x68] sm:$0xff]
        %v313 = vld [vmem:[%s293 + $0x70] sm:$0xff]
        %v314 = vld [vmem:[%s293 + $0x78] sm:$0xff]
        %v315 = vld [vmem:[%s1] sm:$0xff]
        %v316 = vld [vmem:[%s1 + $0x8] sm:$0xff]
        %v317 = vld [vmem:[%s1 + $0x10] sm:$0xff]
        %v318 = vld [vmem:[%s2] sm:$0xff]
        %v319 = vld [vmem:[%s2 + $0x8] sm:$0xff]
        %v320 = vld [vmem:[%s2 + $0x10] sm:$0xff]
        %322 = vset.pattern.permute.xlu0 0
        %323 = vperm.xlu0 %322, %v318
        %v324 = vpop.permute.xlu0 %323
        %327 = vset.pattern.permute.xlu0 0
        %328 = vperm.xlu0 %327, %v319
        %v329 = vpop.permute.xlu0 %328
        %332 = vset.pattern.permute.xlu0 0
        %333 = vperm.xlu0 %332, %v320
        %v334 = vpop.permute.xlu0 %333
        %vm336 = vcmask 130048
        %v338 = vsel %vm336, %v315, 0
        %v341 = vsel %vm336, %v316, 0
        %v344 = vsel %vm336, %v317, 0
        %v347 = vsel %vm336, %v299, 0
        %v350 = vsel %vm336, %v300, 0
        %v353 = vsel %vm336, %v301, 0
        %v356 = vsel %vm336, %v302, 0
        %v359 = vsel %vm336, %v303, 0
        %v362 = vsel %vm336, %v304, 0
        %v365 = vsel %vm336, %v305, 0
        %v368 = vsel %vm336, %v306, 0
        %v371 = vsel %vm336, %v307, 0
        %v374 = vsel %vm336, %v308, 0
        %v377 = vsel %vm336, %v309, 0
        %v380 = vsel %vm336, %v310, 0
        %v383 = vsel %vm336, %v311, 0
        %v386 = vsel %vm336, %v312, 0
        %v389 = vsel %vm336, %v313, 0
        %v392 = vsel %vm336, %v314, 0
        %394 = vmatprep.subr.mxu0 0.0
        %395 = vmatpush1.xpose.msra.mxu0 %v347
        %396 = vmatprep.subr.mxu0 0.0
        %397 = vmatpush1.xpose.msra.mxu0 %v350
        %398 = vmatprep.subr.mxu0 0.0
        %399 = vmatpush1.xpose.msra.mxu0 %v353
        %400 = vmatprep.subr.mxu0 0.0
        %401 = vmatpush1.xpose.msra.mxu0 %v356
        %402 = vmatprep.subr.mxu0 0.0
        %403 = vmatpush1.xpose.msra.mxu0 %v359
        %404 = vmatprep.subr.mxu0 0.0
        %405 = vmatpush1.xpose.msra.mxu0 %v362
        %406 = vmatprep.subr.mxu0 0.0
        %407 = vmatpush1.xpose.msra.mxu0 %v365
        %408 = vmatprep.subr.mxu0 0.0
        %409 = vmatpush1.xpose.msra.mxu0 %v368
        %410 = vmatprep.subr.mxu0 0.0
        %411 = vmatpush1.xpose.msra.mxu0 %v371
        %412 = vmatprep.subr.mxu0 0.0
        %413 = vmatpush1.xpose.msra.mxu0 %v374
        %414 = vmatprep.subr.mxu0 0.0
        %415 = vmatpush1.xpose.msra.mxu0 %v377
        %416 = vmatprep.subr.mxu0 0.0
        %417 = vmatpush1.xpose.msra.mxu0 %v380
        %418 = vmatprep.subr.mxu0 0.0
        %419 = vmatpush1.xpose.msra.mxu0 %v383
        %420 = vmatprep.subr.mxu0 0.0
        %421 = vmatpush1.xpose.msra.mxu0 %v386
        %422 = vmatprep.subr.mxu0 0.0
        %423 = vmatpush1.xpose.msra.mxu0 %v389
        %424 = vmatprep.subr.mxu0 0.0
        %425 = vmatpush1.xpose.msra.mxu0 %v392
        %426 = vmatprep.subr.mxu0 0.0
        %427 = vmatpush1.xpose.msra.mxu0 0.0
        %428 = vmatprep.subr.mxu0 0.0
        %429 = vmatpush1.xpose.msra.mxu0 0.0
        %430 = vmatprep.subr.mxu0 0.0
        %431 = vmatpush1.xpose.msra.mxu0 0.0
        %432 = vmatprep.subr.mxu0 0.0
        %433 = vmatpush1.xpose.msra.mxu0 0.0
        %434 = vmatprep.subr.mxu0 0.0
        %435 = vmatpush1.xpose.msra.mxu0 0.0
        %436 = vmatprep.subr.mxu0 0.0
        %437 = vmatpush1.xpose.msra.mxu0 0.0
        %438 = vmatprep.subr.mxu0 0.0
        %439 = vmatpush1.xpose.msra.mxu0 0.0
        %440 = vmatprep.subr.mxu0 0.0
        %441 = vmatpush1.xpose.msra.mxu0 0.0
        %442 = vmatprep.subr.mxu0 0.0
        %443 = vmatpush1.xpose.msra.mxu0 0.0
        %444 = vmatprep.subr.mxu0 0.0
        %445 = vmatpush1.xpose.msra.mxu0 0.0
        %446 = vmatprep.subr.mxu0 0.0
        %447 = vmatpush1.xpose.msra.mxu0 0.0
        %448 = vmatprep.subr.mxu0 0.0
        %449 = vmatpush1.xpose.msra.mxu0 0.0
        %450 = vmatprep.subr.mxu0 0.0
        %451 = vmatpush1.xpose.msra.mxu0 0.0
        %452 = vmatprep.subr.mxu0 0.0
        %453 = vmatpush1.xpose.msra.mxu0 0.0
        %454 = vmatprep.subr.mxu0 0.0
        %455 = vmatpush1.xpose.msra.mxu0 0.0
        %456 = vmatprep.subr.mxu0 0.0
        %457 = vmatpush1.xpose.msra.mxu0 0.0
        %458 = vmatprep.mubr.f32.mxu0 0.0
        %459 = vmatmul.mubr.f32.gmra.mrb[0].mxu0 %v338
        %v460 = vpop.f32.mrb[0].mxu0
        %v461 = vadd.f32 %v324, %v460
        %v462 = vpop.f32.mrb[0].mxu0
        %463 = vmatprep.mubr.f32.mxu0 0.0
        %464 = vmatmul.mubr.f32.gmra.mrb[0].mxu0 %v341
        %v465 = vpop.f32.mrb[0].mxu0
        %v466 = vadd.f32 %v329, %v465
        %v467 = vpop.f32.mrb[0].mxu0
        %468 = vmatprep.mubr.f32.mxu0 0.0
        %469 = vmatmul.mubr.f32.gmra.mrb[0].mxu0 %v344
        %v470 = vpop.f32.mrb[0].mxu0
        %v471 = vadd.f32 %v334, %v470
        %v472 = vpop.f32.mrb[0].mxu0
        %473 = vdwg.mxu0
        %v474 = vmax.f32 %v461, 0.0
        %v475 = vmax.f32 %v466, 0.0
        %v476 = vmax.f32 %v471, 0.0
        %v477 = vld [vmem:[%s3] sm:$0xff]
        %v478 = vld [vmem:[%s3 + $0x8] sm:$0xff]
        %v479 = vld [vmem:[%s3 + $0x10] sm:$0xff]
        %v480 = vld [vmem:[%s4] sm:$0xff]
        %v481 = vld [vmem:[%s4 + $0x8] sm:$0xff]
        %v482 = vld [vmem:[%s4 + $0x10] sm:$0xff]
        %484 = vset.pattern.permute.xlu0 0
        %485 = vperm.xlu0 %484, %v480
        %v486 = vpop.permute.xlu0 %485
        %489 = vset.pattern.permute.xlu0 0
        %490 = vperm.xlu0 %489, %v481
        %v491 = vpop.permute.xlu0 %490
        %494 = vset.pattern.permute.xlu0 0
        %495 = vperm.xlu0 %494, %v482
        %v496 = vpop.permute.xlu0 %495
        %vm498 = vcmask 195584
        %v500 = vsel %vm498, %v477, 0
        %v503 = vsel %vm498, %v478, 0
        %v506 = vsel %vm498, %v479, 0
        %508 = vmatprep.subr.mxu0 0.0
        %509 = vmatpush1.msra.mxu0 %v474
        %510 = vmatprep.subr.mxu0 0.0
        %511 = vmatpush1.msra.mxu0 %v475
        %512 = vmatprep.subr.mxu0 0.0
        %513 = vmatpush1.msra.mxu0 %v476
        %514 = vmatprep.subr.mxu0 0.0
        %515 = vmatpush1.msra.mxu0 0.0
        %516 = vmatprep.subr.mxu0 0.0
        %517 = vmatpush1.msra.mxu0 0.0
        %518 = vmatprep.subr.mxu0 0.0
        %519 = vmatpush1.msra.mxu0 0.0
        %520 = vmatprep.subr.mxu0 0.0
        %521 = vmatpush1.msra.mxu0 0.0
        %522 = vmatprep.subr.mxu0 0.0
        %523 = vmatpush1.msra.mxu0 0.0
        %524 = vmatprep.subr.mxu0 0.0
        %525 = vmatpush1.msra.mxu0 0.0
        %526 = vmatprep.subr.mxu0 0.0
        %527 = vmatpush1.msra.mxu0 0.0
        %528 = vmatprep.subr.mxu0 0.0
        %529 = vmatpush1.msra.mxu0 0.0
        %530 = vmatprep.subr.mxu0 0.0
        %531 = vmatpush1.msra.mxu0 0.0
        %532 = vmatprep.subr.mxu0 0.0
        %533 = vmatpush1.msra.mxu0 0.0
        %534 = vmatprep.subr.mxu0 0.0
        %535 = vmatpush1.msra.mxu0 0.0
        %536 = vmatprep.subr.mxu0 0.0
        %537 = vmatpush1.msra.mxu0 0.0
        %538 = vmatprep.subr.mxu0 0.0
        %539 = vmatpush1.msra.mxu0 0.0
        %540 = vmatprep.subr.mxu0 0.0
        %541 = vmatpush1.msra.mxu0 0.0
        %542 = vmatprep.subr.mxu0 0.0
        %543 = vmatpush1.msra.mxu0 0.0
        %544 = vmatprep.subr.mxu0 0.0
        %545 = vmatpush1.msra.mxu0 0.0
        %546 = vmatprep.subr.mxu0 0.0
        %547 = vmatpush1.msra.mxu0 0.0
        %548 = vmatprep.subr.mxu0 0.0
        %549 = vmatpush1.msra.mxu0 0.0
        %550 = vmatprep.subr.mxu0 0.0
        %551 = vmatpush1.msra.mxu0 0.0
        %552 = vmatprep.subr.mxu0 0.0
        %553 = vmatpush1.msra.mxu0 0.0
        %554 = vmatprep.subr.mxu0 0.0
        %555 = vmatpush1.msra.mxu0 0.0
        %556 = vmatprep.subr.mxu0 0.0
        %557 = vmatpush1.msra.mxu0 0.0
        %558 = vmatprep.subr.mxu0 0.0
        %559 = vmatpush1.msra.mxu0 0.0
        %560 = vmatprep.subr.mxu0 0.0
        %561 = vmatpush1.msra.mxu0 0.0
        %562 = vmatprep.subr.mxu0 0.0
        %563 = vmatpush1.msra.mxu0 0.0
        %564 = vmatprep.subr.mxu0 0.0
        %565 = vmatpush1.msra.mxu0 0.0
        %566 = vmatprep.subr.mxu0 0.0
        %567 = vmatpush1.msra.mxu0 0.0
        %568 = vmatprep.subr.mxu0 0.0
        %569 = vmatpush1.msra.mxu0 0.0
        %570 = vmatprep.subr.mxu0 0.0
        %571 = vmatpush1.msra.mxu0 0.0
        %572 = vmatprep.mubr.f32.mxu0 0.0
        %573 = vmatmul.mubr.f32.gmra.mrb[0].mxu0 %v500
        %v574 = vpop.f32.mrb[0].mxu0
        %v575 = vadd.f32 %v486, %v574
        %v576 = vpop.f32.mrb[0].mxu0
        %577 = vmatprep.mubr.f32.mxu0 0.0
        %578 = vmatmul.mubr.f32.gmra.mrb[0].mxu0 %v503
        %v579 = vpop.f32.mrb[0].mxu0
        %v580 = vadd.f32 %v491, %v579
        %v581 = vpop.f32.mrb[0].mxu0
        %582 = vmatprep.mubr.f32.mxu0 0.0
        %583 = vmatmul.mubr.f32.gmra.mrb[0].mxu0 %v506
        %v584 = vpop.f32.mrb[0].mxu0
        %v585 = vadd.f32 %v496, %v584
        %v586 = vpop.f32.mrb[0].mxu0
        %587 = vdwg.mxu0
        %v588 = vmax.f32 %v575, 0.0
        %v589 = vmax.f32 %v580, 0.0
        %v590 = vmax.f32 %v585, 0.0
        %v591 = vld [vmem:[%s5] sm:$0x3f]
        %v592 = vld [vmem:[%s6] sm:$0x3f]
        %594 = vset.pattern.permute.xlu0 0
        %595 = vperm.xlu0 %594, %v592
        %v596 = vpop.permute.xlu0 %595
        %v599 = vsel %vm498, %v591, 0
        %601 = vmatprep.subr.mxu0 0.0
        %602 = vmatpush1.msra.mxu0 %v588
        %603 = vmatprep.subr.mxu0 0.0
        %604 = vmatpush1.msra.mxu0 %v589
        %605 = vmatprep.subr.mxu0 0.0
        %606 = vmatpush1.msra.mxu0 %v590
        %607 = vmatprep.subr.mxu0 0.0
        %608 = vmatpush1.msra.mxu0 0.0
        %609 = vmatprep.subr.mxu0 0.0
        %610 = vmatpush1.msra.mxu0 0.0
        %611 = vmatprep.subr.mxu0 0.0
        %612 = vmatpush1.msra.mxu0 0.0
        %613 = vmatprep.subr.mxu0 0.0
        %614 = vmatpush1.msra.mxu0 0.0
        %615 = vmatprep.subr.mxu0 0.0
        %616 = vmatpush1.msra.mxu0 0.0
        %617 = vmatprep.subr.mxu0 0.0
        %618 = vmatpush1.msra.mxu0 0.0
        %619 = vmatprep.subr.mxu0 0.0
        %620 = vmatpush1.msra.mxu0 0.0
        %621 = vmatprep.subr.mxu0 0.0
        %622 = vmatpush1.msra.mxu0 0.0
        %623 = vmatprep.subr.mxu0 0.0
        %624 = vmatpush1.msra.mxu0 0.0
        %625 = vmatprep.subr.mxu0 0.0
        %626 = vmatpush1.msra.mxu0 0.0
        %627 = vmatprep.subr.mxu0 0.0
        %628 = vmatpush1.msra.mxu0 0.0
        %629 = vmatprep.subr.mxu0 0.0
        %630 = vmatpush1.msra.mxu0 0.0
        %631 = vmatprep.subr.mxu0 0.0
        %632 = vmatpush1.msra.mxu0 0.0
        %633 = vmatprep.subr.mxu0 0.0
        %634 = vmatpush1.msra.mxu0 0.0
        %635 = vmatprep.subr.mxu0 0.0
        %636 = vmatpush1.msra.mxu0 0.0
        %637 = vmatprep.subr.mxu0 0.0
        %638 = vmatpush1.msra.mxu0 0.0
        %639 = vmatprep.subr.mxu0 0.0
        %640 = vmatpush1.msra.mxu0 0.0
        %641 = vmatprep.subr.mxu0 0.0
        %642 = vmatpush1.msra.mxu0 0.0
        %643 = vmatprep.subr.mxu0 0.0
        %644 = vmatpush1.msra.mxu0 0.0
        %645 = vmatprep.subr.mxu0 0.0
        %646 = vmatpush1.msra.mxu0 0.0
        %647 = vmatprep.subr.mxu0 0.0
        %648 = vmatpush1.msra.mxu0 0.0
        %649 = vmatprep.subr.mxu0 0.0
        %650 = vmatpush1.msra.mxu0 0.0
        %651 = vmatprep.subr.mxu0 0.0
        %652 = vmatpush1.msra.mxu0 0.0
        %653 = vmatprep.subr.mxu0 0.0
        %654 = vmatpush1.msra.mxu0 0.0
        %655 = vmatprep.subr.mxu0 0.0
        %656 = vmatpush1.msra.mxu0 0.0
        %657 = vmatprep.subr.mxu0 0.0
        %658 = vmatpush1.msra.mxu0 0.0
        %659 = vmatprep.subr.mxu0 0.0
        %660 = vmatpush1.msra.mxu0 0.0
        %661 = vmatprep.subr.mxu0 0.0
        %662 = vmatpush1.msra.mxu0 0.0
        %663 = vmatprep.subr.mxu0 0.0
        %664 = vmatpush1.msra.mxu0 0.0
        %665 = vmatprep.mubr.f32.mxu0 0.0
        %666 = vmatmul.mubr.f32.gmra.mrb[0].mxu0 %v599
        %v667 = vpop.f32.mrb[0].mxu0
        %v668 = vadd.f32 %v596, %v667
        %v669 = vpop.f32.mrb[0].mxu0
        %670 = vdwg.mxu0
        %671 = vst [vmem:[%s284] sm:$0x3f] %v668
        %s672 = sand.u32 %s181, 1
        %s673 = scalar_lea.sflag [#allocation3], %s672
        %s674 = sand.u32 %s181, 1
        %s675 = smul.addr %s674, 8
        %s676 = scalar_lea.vmem [#allocation2], %s675
        // Predicated region
        $region49: #{tpu_custom_call.1} parent=47 // pred_check
          %p677 = pneg %p191
        $region50: #{tpu_custom_call.1} parent=47 // pred_check_branch
          %679 = sbr.rel (%p677) target = $region52
        $region51: #{tpu_custom_call.1} parent=47 // pred_region
          %s681 = ssub.s32 128, 128
          %682 = vsyncadd %s673, %s681
          %s683 = smul.addr %s21, 128
          %s684 = scalar_lea.hbm %s7, %s683
          %s686 = sshll.u32 %s676, 4
          %s687 = int_to_ptr.vmem [resolvable:$true] %s686
          %689 = dma.vmem_to_hbm [thread:$0]  %s687, 128, %s684, %s673
        $region52: #{tpu_custom_call.1} parent=47 // pred_fallthru
          _
      $region48: #{tpu_custom_call.1} parent=5 // pred_fallthru
        _
      %p690 = scmp.le.s32.totalorder 2, %s16
      // Predicated region
      $region53: #{tpu_custom_call.1} parent=5 // pred_check
        %p691 = pneg %p690
      $region54: #{tpu_custom_call.1} parent=5 // pred_check_branch
        %693 = sbr.rel (%p691) target = $region56
      $region55: #{tpu_custom_call.1} parent=5 // pred_region
        %s694 = ssub.s32 %s16, 2
        // Predicated region
        $region57: #{tpu_custom_call.1} parent=55 // pred_check
          %p695 = pneg %p197
        $region58: #{tpu_custom_call.1} parent=55 // pred_check_branch
          %697 = sbr.rel (%p695) target = $region60
        $region59: #{tpu_custom_call.1} parent=55 // pred_region
          %s698 = sand.u32 %s182, 1
          %s699 = scalar_lea.sflag [#allocation3], %s698
          %s700 = sand.u32 %s182, 1
          %s701 = smul.addr %s700, 8
          %s702 = scalar_lea.vmem [#allocation2], %s701
          %703 = dma.done %s699, 128
        $region60: #{tpu_custom_call.1} parent=55 // pred_fallthru
          _
      $region56: #{tpu_custom_call.1} parent=5 // pred_fallthru
        _
    $region6: #{tpu_custom_call.1} parent=1 // loop_footer
      %s20 = sadd.s32 1, %s16
    $region7: #{tpu_custom_call.1} parent=1 // loop_footer_branch
      %15 = sbr.rel target = $region3
    $region8: #{tpu_custom_call.1} parent=1 // loop_exit
      _
    %704 = vsyncpa [#allocation3], 1
    %s705 = scalar_lea.sflag [#allocation3], 1
    %706 = vsyncpa %s705, 1

</llo_original>
